<compile_context>
chip_gen: v7x
topology: tpu7x:2x2x1
jax: 0.10.0
libtpu: 0.0.40
codegen_flags: <defaults>
</compile_context>

<pallas_src>
import math
from functools import partial

import jax
import jax.numpy as jnp
from jax.experimental import pallas as pl
from jax.experimental.pallas import tpu as pltpu


def _copy_kernel(x_ref, o_ref):
    # Pure lane-dense 2D tile copy; the flatten itself was done for free
    # (metadata-only reshape) in the wrapper, so no in-kernel relayout.
    o_ref[...] = x_ref[...]


def _sublane_granule(itemsize):
    # Native vreg sublane packing: 8 rows for 32-bit, 16 for 16-bit, 32 for 8-bit.
    return max(8, 32 // max(1, itemsize))


def _choose_tiles(n, flat, itemsize, max_tile_bytes):
    """Pick (tn, tf) so tn*tf*itemsize <= max_tile_bytes, tiles stay lane/sublane
    dense, and large single-block cases are split for megacore parallelism."""
    granule = _sublane_granule(itemsize)

    # Lane (last) dim: bounded multiple of 128. budget_lanes guarantees that
    # even `granule` rows of width tf fit the byte budget.
    lanes_cap = 8192
    budget_lanes = max(128, ((max_tile_bytes // (granule * itemsize)) // 128) * 128)
    lane_limit = min(lanes_cap, budget_lanes)

    if flat <= lane_limit:
        tf = flat                      # full dim (always legal as a block dim)
    else:
        tf = min(lane_limit, max(128, (flat // 128) * 128))   # multiple of 128

    # Sublane (second-to-last) dim from the remaining budget.
    rows_budget = max(1, max_tile_bytes // max(1, tf * itemsize))
    if n <= rows_budget:
        tn = n                         # full dim
    else:
        tn = min(n, max(granule, (rows_budget // granule) * granule))

    # Megacore: if one block would cover the whole (non-trivial) array,
    # split the flat axis so both TensorCores get work on v7x.
    if tn >= n and tf >= flat and flat >= 256 and n * flat * itemsize > (1 << 20):
        tf = max(128, ((flat // 2) // 128) * 128)

    return tn, tf


@partial(jax.jit, static_argnames=("max_tile_bytes",))
def flatten(x, *, max_tile_bytes=2 * 1024 * 1024):
    """Pallas equivalent of torch Flatten: (N, ...) -> (N, prod(rest))."""
    n = x.shape[0]
    flat = math.prod(x.shape[1:]) if x.ndim > 1 else 1

    # Row-major reshape is metadata-only in XLA; identical to torch .view()
    # semantics for contiguous NCHW input.
    x2d = x.reshape(n, flat)

    itemsize = jnp.dtype(x.dtype).itemsize
    tn, tf = _choose_tiles(n, flat, itemsize, max_tile_bytes)

    grid = (pl.cdiv(n, tn), pl.cdiv(flat, tf))
    spec = pl.BlockSpec((tn, tf), lambda i, j: (i, j))

    return pl.pallas_call(
        _copy_kernel,
        out_shape=jax.ShapeDtypeStruct((n, flat), x.dtype),
        grid=grid,
        in_specs=[spec],
        out_specs=spec,
        compiler_params=pltpu.CompilerParams(
            dimension_semantics=("parallel", "parallel"),
        ),
    )(x2d)


if __name__ == "__main__":
    key = jax.random.PRNGKey(0)
    # Small CIFAR-style feature map: N=2, C=4, H=W=16
    x = jax.random.normal(key, (2, 4, 16, 16), dtype=jnp.float32)

    out = flatten(x)
    out = jax.block_until_ready(out)

    # Reference: plain row-major reshape (same as torch .view(-1, C*H*W))
    ref = x.reshape(x.shape[0], -1)
    assert out.shape == (2, 4 * 16 * 16), out.shape
    assert out.dtype == x.dtype
    assert jnp.array_equal(out, ref), "mismatch vs reference reshape"

    print("KERNEL_OK")
</pallas_src>

<mosaic_0001>
module attributes {stable_mosaic.version = 11 : i64} {
  func.func @_copy_kernel(%arg0: i32, %arg1: i32, %arg2: memref<2x1024xf32, #tpu.memory_space<vmem>>, %arg3: memref<2x1024xf32, #tpu.memory_space<vmem>>) attributes {dimension_semantics = [#tpu.dimension_semantics<parallel>, #tpu.dimension_semantics<parallel>], iteration_bounds = array<i64: 1, 1>, scalar_prefetch = 0 : i64, scratch_operands = 0 : i64, tpu.core_type = #tpu.core_type<tc>, window_params = [{transform_indices = @transform_0, window_bounds = array<i64: 2, 1024>}, {transform_indices = @transform_1, window_bounds = array<i64: 2, 1024>}]} {
    %c0 = arith.constant 0 : index
    %c0_0 = arith.constant 0 : index
    %0 = vector.load %arg2[%c0, %c0_0] : memref<2x1024xf32, #tpu.memory_space<vmem>>, vector<2x1024xf32>
    %c0_1 = arith.constant 0 : index
    %c0_2 = arith.constant 0 : index
    %1 = vector.load %arg3[%c0_1, %c0_2] : memref<2x1024xf32, #tpu.memory_space<vmem>>, vector<2x1024xf32>
    tpu.vector_store %arg3[%c0_1, %c0_2], %0 {strides = array<i32>} : memref<2x1024xf32, #tpu.memory_space<vmem>>, vector<2x1024xf32>,
    return
  }
  func.func @transform_0(%arg0: i32, %arg1: i32) -> (i32, i32) {
    %c0_i32 = arith.constant 0 : i32
    return %arg0, %arg1 : i32, i32
  }
  func.func @transform_1(%arg0: i32, %arg1: i32) -> (i32, i32) {
    %c0_i32 = arith.constant 0 : i32
    return %arg0, %arg1 : i32, i32
  }
}

</mosaic_0001>

<llo_original>
// kernel: flatten.1
$region0: #{flatten.1}
  #allocation0 [shape = 'u32[]', space=smem, size = 0x4, offset = 0x4, fixed_abs, tag = 'smem constant byte address 0x4 - core index']
  #allocation1 [shape = 'u32[144,128]{1,0:T(1,128)}', space=vmem, size = 0x12000, scoped, tag = 'internal scratch']
  %s0 = inlined_call_operand.vmem [shape: f32[2,1024], index: 0, kind: input, shape index: {}]
  %s1 = inlined_call_operand.hbm [shape: f32[2,1024], index: 1, kind: output, shape index: {}]
  %s2 = sld [smem:[#allocation0]]
  $region14: #{flatten.1} parent=0
    _
  %s4 = ssub.s32 1, %s2
  %s5 = scalar_select 0, %s4, %s2
  $region1: #{flatten.1} parent=0
    #allocation2 [shape = 'u8[8192]{0}', space=vmem, size = 0x2000, scoped, tag = 'output window, operand 0, single buffered']
    #allocation3 [shape = 's32[1]{0}', space=sflag, size = 0x4, scoped, tag = 'scoped memory for flatten.1']
    %6 = vsyncpa [#allocation3], 0
    // Predicated region
    $region2: #{flatten.1} parent=1 // pred_check
      _
    $region3: #{flatten.1} parent=1 // pred_check_branch
      %8 = sbr.rel (0) target = $region5
    $region4: #{flatten.1} parent=1 // pred_region
      _
    $region5: #{flatten.1} parent=1 // pred_fallthru
      _
    %v9 = vld [vmem:[%s0] sm:$0xff]
    %v10 = vld [vmem:[%s0 + $0x8] sm:$0xff]
    %11 = vst [vmem:[#allocation2] sm:$0xff] %v9
    %12 = vst [vmem:[#allocation2 + $0x8] sm:$0xff] %v10
    // Predicated region
    $region6: #{flatten.1} parent=1 // pred_check
      _
    $region7: #{flatten.1} parent=1 // pred_check_branch
      %14 = sbr.rel (0) target = $region9
    $region8: #{flatten.1} parent=1 // pred_region
      %s16 = ssub.s32 256, 256
      %17 = vsyncadd [#allocation3], %s16
      %s19 = sshll.u32 [#allocation2], 4
      %s20 = int_to_ptr.vmem [resolvable:$true] %s19
      %22 = dma.vmem_to_hbm [thread:$0]  %s20, 256, %s1, [#allocation3]
    $region9: #{flatten.1} parent=1 // pred_fallthru
      _
    // Predicated region
    $region10: #{flatten.1} parent=1 // pred_check
      _
    $region11: #{flatten.1} parent=1 // pred_check_branch
      %24 = sbr.rel (0) target = $region13
    $region12: #{flatten.1} parent=1 // pred_region
      %25 = dma.done [#allocation3], 256
    $region13: #{flatten.1} parent=1 // pred_fallthru
      _
    %26 = vsyncpa [#allocation3], 1

</llo_original>
